<compile_context>
chip_gen: v5e
topology: v5e:2x2
jax: 0.10.0
libtpu: 0.0.40
codegen_flags: <defaults>
</compile_context>

<pallas_src>
import functools

import jax
import jax.numpy as jnp
from jax.experimental import pallas as pl
from jax.experimental.pallas import tpu as pltpu


def _policy_kernel(x_ref, w1t_ref, b1_ref, w2t_ref, b2_ref, o_ref):
    # x_ref  : (TB, IN)  input dtype (f32 or bf16), natural layout
    # w1t_ref: (H, IN) f32     b1_ref: (H, 1) f32
    # w2t_ref: (A, H)  f32     b2_ref: (A, 1) f32
    # o_ref  : (A, TB)  out dtype -- batch on the lane axis (lane-dense stores)
    xT = x_ref[...].astype(jnp.float32).T                         # (IN, TB), XLU
    # fc1: (H, IN) @ (IN, TB) -> (H, TB); f32 x f32 on the MXU, f32 accumulate.
    h = jnp.dot(w1t_ref[...], xT, preferred_element_type=jnp.float32)
    h = jnp.maximum(h + b1_ref[...], 0.0)                         # bias + ReLU
    # fc2: (A, H) @ (H, TB) -> (A, TB)
    logits = jnp.dot(w2t_ref[...], h, preferred_element_type=jnp.float32)
    logits = logits + b2_ref[...]
    # Softmax over actions (axis 0), numerically stable; reciprocal -> EUP.
    m = jnp.max(logits, axis=0, keepdims=True)
    e = jnp.exp(logits - m)
    s = jnp.sum(e, axis=0, keepdims=True)
    o_ref[...] = (e * pl.reciprocal(s, approx=True)).astype(o_ref.dtype)


def _round_up(n, m):
    return ((n + m - 1) // m) * m


@functools.partial(jax.jit, static_argnames=("tb", "out_dtype"))
def policy_net_forward(x, w1, b1, w2, b2, *, tb=8192, out_dtype=jnp.float32):
    """x: (B, in); w1: (in, H); b1: (1, H); w2: (H, A); b2: (1, A).
    Returns action_probs (B, A) in out_dtype.  x is streamed in its own dtype
    (pass a bf16 x to halve the dominant HBM read); all matmuls run in f32."""
    assert tb % 128 == 0, "batch tile must be a multiple of the 128-wide lane axis"
    B, in_features = x.shape
    hidden = w1.shape[1]
    action_size = w2.shape[1]

    # Big tiles amortise per-grid-step overhead, but keep >=2 tiles when the
    # batch allows so megacore parts (v7x) can shard them.
    tb_eff = min(tb, max(128, _round_up((B + 1) // 2, 128)))
    grid = (pl.cdiv(B, tb_eff),)
    bp_out = grid[0] * tb_eff          # output padded to whole tiles: unmasked stores

    # Tiny parameter arrays: pre-transpose so the kernel is a plain dot chain.
    w1t = w1.T.astype(jnp.float32)                        # (H, IN)
    w2t = w2.T.astype(jnp.float32)                        # (A, H)
    b1c = b1.reshape(hidden, 1).astype(jnp.float32)       # (H, 1)
    b2c = b2.reshape(action_size, 1).astype(jnp.float32)  # (A, 1)

    out = pl.pallas_call(
        _policy_kernel,
        out_shape=jax.ShapeDtypeStruct((action_size, bp_out), out_dtype),
        grid=grid,
        in_specs=[
            pl.BlockSpec((tb_eff, in_features), lambda i: (i, 0)),   # x: batch-tiled, natural layout
            pl.BlockSpec((hidden, in_features), lambda i: (0, 0)),   # W1^T resident
            pl.BlockSpec((hidden, 1), lambda i: (0, 0)),             # b1 resident
            pl.BlockSpec((action_size, hidden), lambda i: (0, 0)),   # W2^T resident
            pl.BlockSpec((action_size, 1), lambda i: (0, 0)),        # b2 resident
        ],
        out_specs=pl.BlockSpec((action_size, tb_eff), lambda i: (0, i)),
        compiler_params=pltpu.CompilerParams(
            dimension_semantics=("parallel",),   # shard batch tiles across TCs
            vmem_limit_bytes=32 * 1024 * 1024,   # ~6 MiB working set @ tb=8192; explicit for v5e's 16 MiB default
        ),
    )(x, w1t, b1c, w2t, b2c)

    # Back to the module's (B, A) layout.
    # TODO(synk): skip this transpose if the consumer can take (A, B) directly
    # (saves one extra pass over the output).
    return out[:, :B].T


def init_params(key, input_size=8, action_size=4, hidden_size=128):
    """Deterministic init mimicking PyTorch nn.Linear defaults (U[-1/sqrt(fan_in), +])."""
    k1, k2, k3, k4 = jax.random.split(key, 4)
    bound1 = 1.0 / jnp.sqrt(input_size)
    bound2 = 1.0 / jnp.sqrt(hidden_size)
    w1 = jax.random.uniform(k1, (input_size, hidden_size), jnp.float32, -bound1, bound1)
    b1 = jax.random.uniform(k2, (1, hidden_size), jnp.float32, -bound1, bound1)
    w2 = jax.random.uniform(k3, (hidden_size, action_size), jnp.float32, -bound2, bound2)
    b2 = jax.random.uniform(k4, (1, action_size), jnp.float32, -bound2, bound2)
    return w1, b1, w2, b2


def _reference(x, w1, b1, w2, b2):
    h = jnp.maximum(x.astype(jnp.float32) @ w1 + b1, 0.0)
    logits = h @ w2 + b2
    return jax.nn.softmax(logits, axis=-1)


if __name__ == "__main__":
    key = jax.random.PRNGKey(0)
    kx, kp = jax.random.split(key)

    # Small shapes matching the module (LunarLander obs = 8, actions = 4).
    batch = 2
    x = jax.random.normal(kx, (batch, 8), jnp.float32)
    w1, b1, w2, b2 = init_params(kp)
    ref = _reference(x, w1, b1, w2, b2)

    # Default path: f32 streaming, f32 output (tight check; approx reciprocal is
    # the only deviation from the reference).
    probs = jax.block_until_ready(policy_net_forward(x, w1, b1, w2, b2))
    assert probs.shape == (batch, 4)
    assert jnp.allclose(probs, ref, atol=2e-3, rtol=2e-3)
    assert jnp.allclose(jnp.sum(probs, axis=-1), 1.0, atol=2e-3)

    # bf16-streamed x (halves the dominant HBM read); matmuls still f32 x f32.
    probs_bf16_in = jax.block_until_ready(
        policy_net_forward(x.astype(jnp.bfloat16), w1, b1, w2, b2))
    assert probs_bf16_in.shape == (batch, 4)
    assert jnp.allclose(probs_bf16_in, ref, atol=5e-2, rtol=5e-2)

    # bf16 writeback (halves output HBM traffic); softmax math stays f32.
    probs_bf16_out = jax.block_until_ready(
        policy_net_forward(x, w1, b1, w2, b2, out_dtype=jnp.bfloat16))
    assert probs_bf16_out.shape == (batch, 4)
    assert jnp.allclose(probs_bf16_out.astype(jnp.float32), ref, atol=2e-2, rtol=2e-2)

    # Larger, non-tile-multiple batch: exercises the multi-tile grid, megacore
    # guard, and the masked ragged last block (no wrapper-side padding).
    big = 4096 + 37
    xb = jax.random.normal(kx, (big, 8), jnp.float32)
    refb = _reference(xb, w1, b1, w2, b2)
    pb = jax.block_until_ready(policy_net_forward(xb, w1, b1, w2, b2))
    assert pb.shape == (big, 4)
    assert jnp.allclose(pb, refb, atol=2e-3, rtol=2e-3)

    print("KERNEL_OK")
</pallas_src>

<mosaic_0001>
module attributes {stable_mosaic.version = 11 : i64} {
  func.func @_policy_kernel(%arg0: i32, %arg1: memref<128x8xf32, #tpu.memory_space<vmem>>, %arg2: memref<128x8xf32, #tpu.memory_space<vmem>>, %arg3: memref<128x1xf32, #tpu.memory_space<vmem>>, %arg4: memref<4x128xf32, #tpu.memory_space<vmem>>, %arg5: memref<4x1xf32, #tpu.memory_space<vmem>>, %arg6: memref<4x128xf32, #tpu.memory_space<vmem>>) attributes {dimension_semantics = [#tpu.dimension_semantics<parallel>], iteration_bounds = array<i64: 1>, scalar_prefetch = 0 : i64, scratch_operands = 0 : i64, tpu.core_type = #tpu.core_type<tc>, window_params = [{transform_indices = @transform_0, window_bounds = array<i64: 128, 8>}, {pipeline_mode = #tpu.pipeline_mode<synchronous>, transform_indices = @transform_1, window_bounds = array<i64: 128, 8>}, {pipeline_mode = #tpu.pipeline_mode<synchronous>, transform_indices = @transform_2, window_bounds = array<i64: 128, 1>}, {pipeline_mode = #tpu.pipeline_mode<synchronous>, transform_indices = @transform_3, window_bounds = array<i64: 4, 128>}, {pipeline_mode = #tpu.pipeline_mode<synchronous>, transform_indices = @transform_4, window_bounds = array<i64: 4, 1>}, {transform_indices = @transform_5, window_bounds = array<i64: 4, 128>}]} {
    %c0 = arith.constant 0 : index
    %c0_0 = arith.constant 0 : index
    %0 = vector.load %arg1[%c0, %c0_0] : memref<128x8xf32, #tpu.memory_space<vmem>>, vector<128x8xf32>
    %1 = tpu.transpose %0, [1, 0] : vector<128x8xf32> -> vector<8x128xf32>
    %c0_1 = arith.constant 0 : index
    %c0_2 = arith.constant 0 : index
    %2 = vector.load %arg2[%c0_1, %c0_2] : memref<128x8xf32, #tpu.memory_space<vmem>>, vector<128x8xf32>
    %cst = arith.constant dense<0.000000e+00> : vector<128x128xf32>
    %3 = tpu.matmul %2, %1, %cst {dimension_numbers = #tpu.dot_dimension_numbers<[1], [0], [0], [1], [0, 0, 1, 1], [], []>} : vector<128x8xf32>, vector<8x128xf32>, vector<128x128xf32> -> vector<128x128xf32>
    %c0_3 = arith.constant 0 : index
    %c0_4 = arith.constant 0 : index
    %4 = vector.load %arg3[%c0_3, %c0_4] : memref<128x1xf32, #tpu.memory_space<vmem>>, vector<128x1xf32>
    %5 = vector.broadcast %4 : vector<128x1xf32> to vector<128x128xf32>
    %6 = arith.addf %3, %5 : vector<128x128xf32>
    %cst_5 = arith.constant 0.000000e+00 : f32
    %7 = vector.broadcast %cst_5 : f32 to vector<128x128xf32>
    %8 = arith.maximumf %6, %7 : vector<128x128xf32>
    %c0_6 = arith.constant 0 : index
    %c0_7 = arith.constant 0 : index
    %9 = vector.load %arg4[%c0_6, %c0_7] : memref<4x128xf32, #tpu.memory_space<vmem>>, vector<4x128xf32>
    %cst_8 = arith.constant dense<0.000000e+00> : vector<4x128xf32>
    %10 = tpu.matmul %9, %8, %cst_8 {dimension_numbers = #tpu.dot_dimension_numbers<[1], [0], [0], [1], [0, 0, 1, 1], [], []>} : vector<4x128xf32>, vector<128x128xf32>, vector<4x128xf32> -> vector<4x128xf32>
    %c0_9 = arith.constant 0 : index
    %c0_10 = arith.constant 0 : index
    %11 = vector.load %arg5[%c0_9, %c0_10] : memref<4x1xf32, #tpu.memory_space<vmem>>, vector<4x1xf32>
    %12 = vector.broadcast %11 : vector<4x1xf32> to vector<4x128xf32>
    %13 = arith.addf %10, %12 : vector<4x128xf32>
    %cst_11 = arith.constant dense<0xFF800000> : vector<128xf32>
    %14 = vector.multi_reduction <maximumf>, %13, %cst_11 [0] : vector<4x128xf32> to vector<128xf32>
    %15 = vector.shape_cast %14 : vector<128xf32> to vector<1x128xf32>
    %16 = vector.broadcast %15 : vector<1x128xf32> to vector<4x128xf32>
    %17 = arith.subf %13, %16 : vector<4x128xf32>
    %18 = math.exp %17 : vector<4x128xf32>
    %cst_12 = arith.constant dense<0.000000e+00> : vector<128xf32>
    %19 = vector.multi_reduction <add>, %18, %cst_12 [0] : vector<4x128xf32> to vector<128xf32>
    %20 = vector.shape_cast %19 : vector<128xf32> to vector<1x128xf32>
    %21 = tpu.reciprocal %20 {approx = true} : vector<1x128xf32> -> vector<1x128xf32>
    %22 = vector.broadcast %21 : vector<1x128xf32> to vector<4x128xf32>
    %23 = arith.mulf %18, %22 : vector<4x128xf32>
    %c0_13 = arith.constant 0 : index
    %c0_14 = arith.constant 0 : index
    %24 = vector.load %arg6[%c0_13, %c0_14] : memref<4x128xf32, #tpu.memory_space<vmem>>, vector<4x128xf32>
    tpu.vector_store %arg6[%c0_13, %c0_14], %23 {strides = array<i32>} : memref<4x128xf32, #tpu.memory_space<vmem>>, vector<4x128xf32>,
    return
  }
  func.func @transform_0(%arg0: i32) -> (i32, i32) {
    %c0_i32 = arith.constant 0 : i32
    %c0_i32_0 = arith.constant 0 : i32
    return %arg0, %c0_i32 : i32, i32
  }
  func.func @transform_1(%arg0: i32) -> (i32, i32) {
    %c0_i32 = arith.constant 0 : i32
    %c0_i32_0 = arith.constant 0 : i32
    %c0_i32_1 = arith.constant 0 : i32
    return %c0_i32, %c0_i32_0 : i32, i32
  }
  func.func @transform_2(%arg0: i32) -> (i32, i32) {
    %c0_i32 = arith.constant 0 : i32
    %c0_i32_0 = arith.constant 0 : i32
    %c0_i32_1 = arith.constant 0 : i32
    return %c0_i32, %c0_i32_0 : i32, i32
  }
  func.func @transform_3(%arg0: i32) -> (i32, i32) {
    %c0_i32 = arith.constant 0 : i32
    %c0_i32_0 = arith.constant 0 : i32
    %c0_i32_1 = arith.constant 0 : i32
    return %c0_i32, %c0_i32_0 : i32, i32
  }
  func.func @transform_4(%arg0: i32) -> (i32, i32) {
    %c0_i32 = arith.constant 0 : i32
    %c0_i32_0 = arith.constant 0 : i32
    %c0_i32_1 = arith.constant 0 : i32
    return %c0_i32, %c0_i32_0 : i32, i32
  }
  func.func @transform_5(%arg0: i32) -> (i32, i32) {
    %c0_i32 = arith.constant 0 : i32
    %c0_i32_0 = arith.constant 0 : i32
    return %c0_i32, %arg0 : i32, i32
  }
}

</mosaic_0001>

<llo_original>
// kernel: policy_net_forward.1
$region0: #{policy_net_forward.1}
  #allocation0 [shape = 'u32[]', space=smem, size = 0x4, offset = 0x4, fixed_abs, tag = 'smem constant byte address 0x4 - core index']
  #allocation1 [shape = 'u32[72,128]{1,0:T(1,128)}', space=vmem, size = 0x9000, scoped, tag = 'internal scratch']
  %s0 = inlined_call_operand.vmem [shape: f32[2,8], index: 0, kind: input, shape index: {}]
  %s1 = inlined_call_operand.vmem [shape: f32[128,8], index: 1, kind: input, shape index: {}]
  %s2 = inlined_call_operand.vmem [shape: f32[128,1], index: 2, kind: input, shape index: {}]
  %s3 = inlined_call_operand.vmem [shape: f32[4,128], index: 3, kind: input, shape index: {}]
  %s4 = inlined_call_operand.vmem [shape: f32[4,1], index: 4, kind: input, shape index: {}]
  %s5 = inlined_call_operand.vmem [shape: f32[4,128], index: 5, kind: output, shape index: {}]
  %s6 = sld [smem:[#allocation0]]
  $region30: #{policy_net_forward.1} parent=0
    _
  %s8 = ssub.s32 1, %s6
  %s9 = scalar_select 0, %s8, %s6
  // Predicated region
  $region2: #{policy_net_forward.1} parent=0 // pred_check
    _
  $region3: #{policy_net_forward.1} parent=0 // pred_check_branch
    %11 = sbr.rel (0) target = $region5
  $region4: #{policy_net_forward.1} parent=0 // pred_region
    _
  $region5: #{policy_net_forward.1} parent=0 // pred_fallthru
    _
  // Predicated region
  $region6: #{policy_net_forward.1} parent=0 // pred_check
    _
  $region7: #{policy_net_forward.1} parent=0 // pred_check_branch
    %13 = sbr.rel (0) target = $region9
  $region8: #{policy_net_forward.1} parent=0 // pred_region
    _
  $region9: #{policy_net_forward.1} parent=0 // pred_fallthru
    _
  // Predicated region
  $region10: #{policy_net_forward.1} parent=0 // pred_check
    _
  $region11: #{policy_net_forward.1} parent=0 // pred_check_branch
    %15 = sbr.rel (0) target = $region13
  $region12: #{policy_net_forward.1} parent=0 // pred_region
    _
  $region13: #{policy_net_forward.1} parent=0 // pred_fallthru
    _
  // Predicated region
  $region14: #{policy_net_forward.1} parent=0 // pred_check
    _
  $region15: #{policy_net_forward.1} parent=0 // pred_check_branch
    %17 = sbr.rel (0) target = $region17
  $region16: #{policy_net_forward.1} parent=0 // pred_region
    _
  $region17: #{policy_net_forward.1} parent=0 // pred_fallthru
    _
  // Predicated region
  $region18: #{policy_net_forward.1} parent=0 // pred_check
    _
  $region19: #{policy_net_forward.1} parent=0 // pred_check_branch
    %19 = sbr.rel (0) target = $region21
  $region20: #{policy_net_forward.1} parent=0 // pred_region
    _
  $region21: #{policy_net_forward.1} parent=0 // pred_fallthru
    _
  %v20 = vld [vmem:[%s0] sm:$0xff]
  %v21 = vld [vmem:[%s0 + $0x8] sm:$0xff]
  %v22 = vld [vmem:[%s0 + $0x10] sm:$0xff]
  %v23 = vld [vmem:[%s0 + $0x18] sm:$0xff]
  %v24 = vld [vmem:[%s0 + $0x20] sm:$0xff]
  %v25 = vld [vmem:[%s0 + $0x28] sm:$0xff]
  %v26 = vld [vmem:[%s0 + $0x30] sm:$0xff]
  %v27 = vld [vmem:[%s0 + $0x38] sm:$0xff]
  %v28 = vld [vmem:[%s0 + $0x40] sm:$0xff]
  %v29 = vld [vmem:[%s0 + $0x48] sm:$0xff]
  %v30 = vld [vmem:[%s0 + $0x50] sm:$0xff]
  %v31 = vld [vmem:[%s0 + $0x58] sm:$0xff]
  %v32 = vld [vmem:[%s0 + $0x60] sm:$0xff]
  %v33 = vld [vmem:[%s0 + $0x68] sm:$0xff]
  %v34 = vld [vmem:[%s0 + $0x70] sm:$0xff]
  %v35 = vld [vmem:[%s0 + $0x78] sm:$0xff]
  %v36 = vld [vmem:[%s1] sm:$0xff]
  %v37 = vld [vmem:[%s1 + $0x8] sm:$0xff]
  %v38 = vld [vmem:[%s1 + $0x10] sm:$0xff]
  %v39 = vld [vmem:[%s1 + $0x18] sm:$0xff]
  %v40 = vld [vmem:[%s1 + $0x20] sm:$0xff]
  %v41 = vld [vmem:[%s1 + $0x28] sm:$0xff]
  %v42 = vld [vmem:[%s1 + $0x30] sm:$0xff]
  %v43 = vld [vmem:[%s1 + $0x38] sm:$0xff]
  %v44 = vld [vmem:[%s1 + $0x40] sm:$0xff]
  %v45 = vld [vmem:[%s1 + $0x48] sm:$0xff]
  %v46 = vld [vmem:[%s1 + $0x50] sm:$0xff]
  %v47 = vld [vmem:[%s1 + $0x58] sm:$0xff]
  %v48 = vld [vmem:[%s1 + $0x60] sm:$0xff]
  %v49 = vld [vmem:[%s1 + $0x68] sm:$0xff]
  %v50 = vld [vmem:[%s1 + $0x70] sm:$0xff]
  %v51 = vld [vmem:[%s1 + $0x78] sm:$0xff]
  %v52 = vld [vmem:[%s2] sm:$0xff]
  %v53 = vld [vmem:[%s2 + $0x8] sm:$0xff]
  %v54 = vld [vmem:[%s2 + $0x10] sm:$0xff]
  %v55 = vld [vmem:[%s2 + $0x18] sm:$0xff]
  %v56 = vld [vmem:[%s2 + $0x20] sm:$0xff]
  %v57 = vld [vmem:[%s2 + $0x28] sm:$0xff]
  %v58 = vld [vmem:[%s2 + $0x30] sm:$0xff]
  %v59 = vld [vmem:[%s2 + $0x38] sm:$0xff]
  %v60 = vld [vmem:[%s2 + $0x40] sm:$0xff]
  %v61 = vld [vmem:[%s2 + $0x48] sm:$0xff]
  %v62 = vld [vmem:[%s2 + $0x50] sm:$0xff]
  %v63 = vld [vmem:[%s2 + $0x58] sm:$0xff]
  %v64 = vld [vmem:[%s2 + $0x60] sm:$0xff]
  %v65 = vld [vmem:[%s2 + $0x68] sm:$0xff]
  %v66 = vld [vmem:[%s2 + $0x70] sm:$0xff]
  %v67 = vld [vmem:[%s2 + $0x78] sm:$0xff]
  %69 = vset.pattern.permute.xlu0 0
  %70 = vperm.xlu0 %69, %v52
  %v71 = vpop.permute.xlu0 %70
  %74 = vset.pattern.permute.xlu0 0
  %75 = vperm.xlu0 %74, %v53
  %v76 = vpop.permute.xlu0 %75
  %79 = vset.pattern.permute.xlu0 0
  %80 = vperm.xlu0 %79, %v54
  %v81 = vpop.permute.xlu0 %80
  %84 = vset.pattern.permute.xlu0 0
  %85 = vperm.xlu0 %84, %v55
  %v86 = vpop.permute.xlu0 %85
  %89 = vset.pattern.permute.xlu0 0
  %90 = vperm.xlu0 %89, %v56
  %v91 = vpop.permute.xlu0 %90
  %94 = vset.pattern.permute.xlu0 0
  %95 = vperm.xlu0 %94, %v57
  %v96 = vpop.permute.xlu0 %95
  %99 = vset.pattern.permute.xlu0 0
  %100 = vperm.xlu0 %99, %v58
  %v101 = vpop.permute.xlu0 %100
  %104 = vset.pattern.permute.xlu0 0
  %105 = vperm.xlu0 %104, %v59
  %v106 = vpop.permute.xlu0 %105
  %109 = vset.pattern.permute.xlu0 0
  %110 = vperm.xlu0 %109, %v60
  %v111 = vpop.permute.xlu0 %110
  %114 = vset.pattern.permute.xlu0 0
  %115 = vperm.xlu0 %114, %v61
  %v116 = vpop.permute.xlu0 %115
  %119 = vset.pattern.permute.xlu0 0
  %120 = vperm.xlu0 %119, %v62
  %v121 = vpop.permute.xlu0 %120
  %124 = vset.pattern.permute.xlu0 0
  %125 = vperm.xlu0 %124, %v63
  %v126 = vpop.permute.xlu0 %125
  %129 = vset.pattern.permute.xlu0 0
  %130 = vperm.xlu0 %129, %v64
  %v131 = vpop.permute.xlu0 %130
  %134 = vset.pattern.permute.xlu0 0
  %135 = vperm.xlu0 %134, %v65
  %v136 = vpop.permute.xlu0 %135
  %139 = vset.pattern.permute.xlu0 0
  %140 = vperm.xlu0 %139, %v66
  %v141 = vpop.permute.xlu0 %140
  %144 = vset.pattern.permute.xlu0 0
  %145 = vperm.xlu0 %144, %v67
  %v146 = vpop.permute.xlu0 %145
  %vm148 = vcmask 64512
  %v150 = vsel %vm148, %v36, 0
  %v153 = vsel %vm148, %v37, 0
  %v156 = vsel %vm148, %v38, 0
  %v159 = vsel %vm148, %v39, 0
  %v162 = vsel %vm148, %v40, 0
  %v165 = vsel %vm148, %v41, 0
  %v168 = vsel %vm148, %v42, 0
  %v171 = vsel %vm148, %v43, 0
  %v174 = vsel %vm148, %v44, 0
  %v177 = vsel %vm148, %v45, 0
  %v180 = vsel %vm148, %v46, 0
  %v183 = vsel %vm148, %v47, 0
  %v186 = vsel %vm148, %v48, 0
  %v189 = vsel %vm148, %v49, 0
  %v192 = vsel %vm148, %v50, 0
  %v195 = vsel %vm148, %v51, 0
  %v198 = vsel %vm148, %v20, 0
  %v201 = vsel %vm148, %v21, 0
  %v204 = vsel %vm148, %v22, 0
  %v207 = vsel %vm148, %v23, 0
  %v210 = vsel %vm148, %v24, 0
  %v213 = vsel %vm148, %v25, 0
  %v216 = vsel %vm148, %v26, 0
  %v219 = vsel %vm148, %v27, 0
  %v222 = vsel %vm148, %v28, 0
  %v225 = vsel %vm148, %v29, 0
  %v228 = vsel %vm148, %v30, 0
  %v231 = vsel %vm148, %v31, 0
  %v234 = vsel %vm148, %v32, 0
  %v237 = vsel %vm148, %v33, 0
  %v240 = vsel %vm148, %v34, 0
  %v243 = vsel %vm148, %v35, 0
  %245 = vmatpush.xpose.msra.mxu0 %v243
  %246 = vmatpush.xpose.msra.mxu0 %v240
  %247 = vmatpush.xpose.msra.mxu0 %v237
  %248 = vmatpush.xpose.msra.mxu0 %v234
  %249 = vmatpush.xpose.msra.mxu0 %v231
  %250 = vmatpush.xpose.msra.mxu0 %v228
  %251 = vmatpush.xpose.msra.mxu0 %v225
  %252 = vmatpush.xpose.msra.mxu0 %v222
  %253 = vmatpush.xpose.msra.mxu0 %v219
  %254 = vmatpush.xpose.msra.mxu0 %v216
  %255 = vmatpush.xpose.msra.mxu0 %v213
  %256 = vmatpush.xpose.msra.mxu0 %v210
  %257 = vmatpush.xpose.msra.mxu0 %v207
  %258 = vmatpush.xpose.msra.mxu0 %v204
  %259 = vmatpush.xpose.msra.mxu0 %v201
  %260 = vmatpush.xpose.msra.mxu0 %v198
  %261 = vmatmul.f32.gmra.mxu0 %v150
  %v262 = vpop.f32.mrf.mxu0
  %v263 = vadd.f32 %v71, %v262
  %264 = vmatmul.f32.gmra.mxu0 %v153
  %v265 = vpop.f32.mrf.mxu0
  %v266 = vadd.f32 %v76, %v265
  %267 = vmatmul.f32.gmra.mxu0 %v156
  %v268 = vpop.f32.mrf.mxu0
  %v269 = vadd.f32 %v81, %v268
  %270 = vmatmul.f32.gmra.mxu0 %v159
  %v271 = vpop.f32.mrf.mxu0
  %v272 = vadd.f32 %v86, %v271
  %273 = vmatmul.f32.gmra.mxu0 %v162
  %v274 = vpop.f32.mrf.mxu0
  %v275 = vadd.f32 %v91, %v274
  %276 = vmatmul.f32.gmra.mxu0 %v165
  %v277 = vpop.f32.mrf.mxu0
  %v278 = vadd.f32 %v96, %v277
  %279 = vmatmul.f32.gmra.mxu0 %v168
  %v280 = vpop.f32.mrf.mxu0
  %v281 = vadd.f32 %v101, %v280
  %282 = vmatmul.f32.gmra.mxu0 %v171
  %v283 = vpop.f32.mrf.mxu0
  %v284 = vadd.f32 %v106, %v283
  %285 = vmatmul.f32.gmra.mxu0 %v174
  %v286 = vpop.f32.mrf.mxu0
  %v287 = vadd.f32 %v111, %v286
  %288 = vmatmul.f32.gmra.mxu0 %v177
  %v289 = vpop.f32.mrf.mxu0
  %v290 = vadd.f32 %v116, %v289
  %291 = vmatmul.f32.gmra.mxu0 %v180
  %v292 = vpop.f32.mrf.mxu0
  %v293 = vadd.f32 %v121, %v292
  %294 = vmatmul.f32.gmra.mxu0 %v183
  %v295 = vpop.f32.mrf.mxu0
  %v296 = vadd.f32 %v126, %v295
  %297 = vmatmul.f32.gmra.mxu0 %v186
  %v298 = vpop.f32.mrf.mxu0
  %v299 = vadd.f32 %v131, %v298
  %300 = vmatmul.f32.gmra.mxu0 %v189
  %v301 = vpop.f32.mrf.mxu0
  %v302 = vadd.f32 %v136, %v301
  %303 = vmatmul.f32.gmra.mxu0 %v192
  %v304 = vpop.f32.mrf.mxu0
  %v305 = vadd.f32 %v141, %v304
  %306 = vmatmul.f32.gmra.mxu0 %v195
  %v307 = vpop.f32.mrf.mxu0
  %v308 = vadd.f32 %v146, %v307
  %309 = vdwg.mxu0
  %v310 = vmax.f32 %v263, 0.0
  %v311 = vmax.f32 %v266, 0.0
  %v312 = vmax.f32 %v269, 0.0
  %v313 = vmax.f32 %v272, 0.0
  %v314 = vmax.f32 %v275, 0.0
  %v315 = vmax.f32 %v278, 0.0
  %v316 = vmax.f32 %v281, 0.0
  %v317 = vmax.f32 %v284, 0.0
  %v318 = vmax.f32 %v287, 0.0
  %v319 = vmax.f32 %v290, 0.0
  %v320 = vmax.f32 %v293, 0.0
  %v321 = vmax.f32 %v296, 0.0
  %v322 = vmax.f32 %v299, 0.0
  %v323 = vmax.f32 %v302, 0.0
  %v324 = vmax.f32 %v305, 0.0
  %v325 = vmax.f32 %v308, 0.0
  %v326 = vld [vmem:[%s3] sm:$0xf]
  %v327 = vld [vmem:[%s4] sm:$0xf]
  %329 = vset.pattern.permute.xlu0 0
  %330 = vperm.xlu0 %329, %v327
  %v331 = vpop.permute.xlu0 %330
  %333 = vmatpush.msra.mxu0 %v325
  %334 = vmatpush.msra.mxu0 %v324
  %335 = vmatpush.msra.mxu0 %v323
  %336 = vmatpush.msra.mxu0 %v322
  %337 = vmatpush.msra.mxu0 %v321
  %338 = vmatpush.msra.mxu0 %v320
  %339 = vmatpush.msra.mxu0 %v319
  %340 = vmatpush.msra.mxu0 %v318
  %341 = vmatpush.msra.mxu0 %v317
  %342 = vmatpush.msra.mxu0 %v316
  %343 = vmatpush.msra.mxu0 %v315
  %344 = vmatpush.msra.mxu0 %v314
  %345 = vmatpush.msra.mxu0 %v313
  %346 = vmatpush.msra.mxu0 %v312
  %347 = vmatpush.msra.mxu0 %v311
  %348 = vmatpush.msra.mxu0 %v310
  %349 = vmatmul.f32.gmra.mxu0 %v326
  %v350 = vpop.f32.mrf.mxu0
  %v351 = vadd.f32 %v331, %v350
  %352 = vdwg.mxu0
  %vm353 = vcmask 1043456
  %v354 = vsel %vm353, %v351, -inf
  %v355 = vrot.slane %v354, 4
  %v356 = vmax.f32 %v354, %v355
  %v357 = vrot.slane %v356, 2
  %v358 = vmax.f32 %v356, %v357
  %v359 = vrot.slane %v358, 1
  %v360 = vmax.f32 %v358, %v359
  %v361 = vsub.f32 %v351, %v360
  %v362 = vmul.f32 %v361, 1.442695
  %v363 = vpow.pop %v362
  %v364 = vsel %vm353, %v363, 0.0
  %v365 = vrot.slane %v364, 4
  %v366 = vadd.f32 %v364, %v365
  %v367 = vrot.slane %v366, 2
  %v368 = vadd.f32 %v366, %v367
  %v369 = vrot.slane %v368, 1
  %v370 = vadd.f32 %v368, %v369
  %v371 = vrcp.pop %v370
  %v372 = vmul.f32 %v363, %v371
  %373 = vst [vmem:[%s5] sm:$0xf] %v372
  // Predicated region
  $region22: #{policy_net_forward.1} parent=0 // pred_check
    _
  $region23: #{policy_net_forward.1} parent=0 // pred_check_branch
    %375 = sbr.rel (0) target = $region25
  $region24: #{policy_net_forward.1} parent=0 // pred_region
    _
  $region25: #{policy_net_forward.1} parent=0 // pred_fallthru
    _
  // Predicated region
  $region26: #{policy_net_forward.1} parent=0 // pred_check
    _
  $region27: #{policy_net_forward.1} parent=0 // pred_check_branch
    %377 = sbr.rel (0) target = $region29
  $region28: #{policy_net_forward.1} parent=0 // pred_region
    _
  $region29: #{policy_net_forward.1} parent=0 // pred_fallthru
    _

</llo_original>
